<compile_context>
chip_gen: v7x
topology: tpu7x:2x2x1
jax: 0.10.0
libtpu: 0.0.40
codegen_flags: <defaults>
</compile_context>

<pallas_src>
import functools

import numpy as np

import jax
import jax.numpy as jnp
from jax import lax
from jax.experimental import pallas as pl
from jax.experimental.pallas import tpu as pltpu


def _dwconv3x3_kernel(x_ref, wb_ref, o_ref, *, B, H, W, C, add_residual):
    """Depthwise 3x3 conv (stride 1, implicit zero pad 1) + bias [+ residual].

    Single grid step, lane-dense flattened layout, batch unrolled statically.

    x_ref  : (B, H, W*C)   input, lane index w*C + c
    wb_ref : (16, W*C)     rows 0..8: tap dh*3+dw = K[c, dh, dw] tiled across W
                           (edge lanes of the dw=0 / dw=2 rows pre-zeroed = the
                           conv's left/right zero padding); row 9: bias tiled
                           across W; rows 10..15: zero padding to 16 sublanes.
    o_ref  : (B, H, W*C)   conv(x) + bias (+ x if add_residual)
    """
    WC = W * C

    # Tap rows and bias, loaded once; they broadcast over the H rows below.
    w = [wb_ref[r] for r in range(9)]                    # 9 x (WC,)
    bias_row = wb_ref[9]                                 # (WC,)

    # Row mask for the vertical (top/bottom) zero padding, hoisted out of the
    # batch loop: only the single wrapped row of each sublane roll is zeroed.
    row = lax.broadcasted_iota(jnp.int32, (H, WC), 0)
    not_first = row > 0
    not_last = row < H - 1

    for b in range(B):                                   # static unroll
        x = x_ref[b]                                     # (H, WC)

        # +-1 pixel horizontal shifts = +-C lane rotations (XLU).  Lanes that
        # wrapped around the image edge are multiplied by pre-zeroed taps in
        # wb, which realizes the conv's left/right zero padding for free.
        x_left = pltpu.roll(x, C, axis=1)                # x[h, w-1, c]
        x_right = pltpu.roll(x, WC - C, axis=1)          # x[h, w+1, c] (= shift -C, kept non-negative)

        h_top = x_left * w[0] + x * w[1] + x_right * w[2]   # kernel row dh = 0
        h_mid = x_left * w[3] + x * w[4] + x_right * w[5]   # kernel row dh = 1
        h_bot = x_left * w[6] + x * w[7] + x_right * w[8]   # kernel row dh = 2

        # Middle kernel row + bias (+ residual) initialize the accumulator.
        acc = h_mid + bias_row
        if add_residual:
            acc = acc + x

        # dh=0 taps read input row h-1 -> shift that contribution down one row;
        # dh=2 taps read input row h+1 -> shift it up one row.  Sublane rolls on
        # the XLU; the one wrapped boundary row per roll is zeroed (= the conv's
        # top/bottom zero padding).
        top_shift = pltpu.roll(h_top, 1, axis=0)         # row h <- h_top[h-1]; row 0 wrapped
        bot_shift = pltpu.roll(h_bot, H - 1, axis=0)     # row h <- h_bot[h+1]; row H-1 wrapped
        acc = acc + jnp.where(not_first, top_shift, 0.0)
        acc = acc + jnp.where(not_last, bot_shift, 0.0)

        o_ref[b] = acc.astype(o_ref.dtype)


def _make_wb(weight, bias, W, dtype):
    """Build the (16, W*C) tap + bias table with edge padding folded in.

    Tiny; under jit with constant weights this constant-folds, and it can be
    precomputed once per (weight, bias) and reused across calls.
    """
    C = bias.shape[0]
    WC = W * C
    taps = jnp.transpose(weight.reshape(C, 9), (1, 0))          # (9, C), row dh*3+dw
    wb9 = jnp.tile(taps, (1, W))                                 # (9, WC)

    # Fold the conv's left/right zero padding into the taps: zero the lanes
    # whose rolled input wrapped around the image edge.
    lane = np.arange(WC)
    mask = np.ones((9, WC), np.float32)
    mask[0::3, :] *= (lane >= C)                # dw = 0 taps read x[:, w-1, :]
    mask[2::3, :] *= (lane < (W - 1) * C)       # dw = 2 taps read x[:, w+1, :]
    wb9 = wb9 * jnp.asarray(mask, dtype)

    bias_row = jnp.tile(bias.reshape(1, C), (1, W))              # (1, WC)
    pad = jnp.zeros((6, WC), dtype)                              # to 16 sublanes
    return jnp.concatenate([wb9, bias_row, pad], axis=0).astype(dtype)


def dwconv3x3_bias(x_nhwc, weight, bias, *, add_residual):
    """x_nhwc: (B, H, W, C); weight: (C, 1, 3, 3) depthwise; bias: (C,).

    Returns depthwise_conv3x3(x) + bias (+ x if add_residual), NHWC.
    """
    B, H, W, C = x_nhwc.shape
    WC = W * C
    x_flat = x_nhwc.reshape(B, H, WC)                            # free, lane-dense
    wb = _make_wb(weight, bias, W, x_nhwc.dtype)

    kernel = functools.partial(
        _dwconv3x3_kernel, B=B, H=H, W=W, C=C, add_residual=add_residual)

    out_flat = pl.pallas_call(
        kernel,
        out_shape=jax.ShapeDtypeStruct((B, H, WC), x_nhwc.dtype),
        grid=(1,),                                               # one step: overhead-bound size
        in_specs=[
            pl.BlockSpec((B, H, WC), lambda i: (0, 0, 0)),
            pl.BlockSpec((16, WC), lambda i: (0, 0)),
        ],
        out_specs=pl.BlockSpec((B, H, WC), lambda i: (0, 0, 0)),
        compiler_params=pltpu.CompilerParams(
            dimension_semantics=("arbitrary",)),
    )(x_flat, wb)
    return out_flat.reshape(B, H, W, C)


def position_cnn_forward(position_cnn, height, width, weight, bias,
                         query_to_ab=None):
    """Reproduces PositionCNN.forward (size=1, groups == embed_dimension).

    position_cnn : (B, area, C) float32
    weight       : (C, 1, 3, 3) depthwise conv weight
    bias         : (C,)
    query_to_ab  : optional host-static (area, 2) numpy array of (a, b) coords
                   (matches the PyTorch module, where it is a numpy attribute)
    """
    B, area, C = position_cnn.shape

    if query_to_ab is None:
        x_nhwc = position_cnn.reshape(B, height, width, C)
        out_nhwc = dwconv3x3_bias(x_nhwc, weight, bias, add_residual=True)
        return out_nhwc.reshape(B, area, C)

    # (a, b) -> (row, col) mapping is resolved at trace time (static data).
    new_ab = (np.asarray(query_to_ab).astype(np.int64) + 110) // 10   # floor div
    rows, cols = new_ab[:, 0], new_ab[:, 1]
    flat = rows * width + cols
    grid_area = height * width

    if flat.shape[0] == grid_area and np.unique(flat).size == grid_area:
        # ab-bin case: (row, col) is a bijection of the HxW grid, so the scatter
        # is an inverse permutation -> one gather, no zeros() + XLA scatter.
        inv = np.argsort(flat)
        cnn_feat = position_cnn[:, inv, :].reshape(B, height, width, C)
        conv_out = dwconv3x3_bias(cnn_feat, weight, bias, add_residual=False)
        conv_tok = conv_out.reshape(B, grid_area, C)[:, flat, :]   # fused gather
        return position_cnn + conv_tok

    # TODO(synk): general (possibly colliding / partial) per-token scatter has
    # no lane-efficient Pallas form; it stays as a single XLA scatter + gather.
    cnn_feat = jnp.zeros((B, height, width, C), position_cnn.dtype)
    cnn_feat = cnn_feat.at[:, rows, cols, :].set(position_cnn)
    conv_out = dwconv3x3_bias(cnn_feat, weight, bias, add_residual=False)
    return position_cnn + conv_out[:, rows, cols, :]


def _reference_forward(position_cnn, height, width, weight, bias,
                       query_to_ab=None):
    """Pure-JAX reference (lax depthwise conv) mirroring the PyTorch module."""
    B, area, C = position_cnn.shape

    def dwconv(x_nhwc):
        x_nchw = jnp.transpose(x_nhwc, (0, 3, 1, 2))
        y = lax.conv_general_dilated(
            x_nchw, weight, window_strides=(1, 1),
            padding=((1, 1), (1, 1)), feature_group_count=C,
            dimension_numbers=("NCHW", "OIHW", "NCHW"))
        y = y + bias.reshape(1, C, 1, 1)
        return jnp.transpose(y, (0, 2, 3, 1))

    if query_to_ab is not None:
        new_ab = (np.asarray(query_to_ab).astype(np.int64) + 110) // 10
        rows = jnp.asarray(new_ab[:, 0])
        cols = jnp.asarray(new_ab[:, 1])
        cnn_feat = jnp.zeros((B, height, width, C), position_cnn.dtype)
        cnn_feat = cnn_feat.at[:, rows, cols, :].set(position_cnn)
        conv_out = dwconv(cnn_feat)
        return position_cnn + conv_out[:, rows, cols, :]
    else:
        x_nhwc = position_cnn.reshape(B, height, width, C)
        out = dwconv(x_nhwc) + x_nhwc
        return out.reshape(B, area, C)


if __name__ == "__main__":
    key = jax.random.PRNGKey(0)
    k_x, k_w, k_b = jax.random.split(key, 3)

    B, C = 2, 32               # in_channals == embed_dimension == 32
    H = W = 16
    area = H * W

    position_cnn = jax.random.normal(k_x, (B, area, C), jnp.float32)
    weight = jax.random.normal(k_w, (C, 1, 3, 3), jnp.float32) * 0.1
    bias = jax.random.normal(k_b, (C,), jnp.float32) * 0.01

    # ---- branch 1: query_to_ab is None (default path) ----
    out_none = position_cnn_forward(position_cnn, H, W, weight, bias, None)
    out_none = jax.block_until_ready(out_none)
    ref_none = _reference_forward(position_cnn, H, W, weight, bias, None)
    assert out_none.shape == (B, area, C)
    assert jnp.allclose(out_none, ref_none, atol=1e-4, rtol=1e-4)

    # ---- branch 2: query_to_ab given (shuffled bijection of the ab-bin grid) ----
    rows_np = np.arange(area, dtype=np.int64) // W          # 0..H-1
    cols_np = np.arange(area, dtype=np.int64) % W           # 0..W-1
    perm = np.random.RandomState(0).permutation(area)       # nontrivial ordering
    rows_np, cols_np = rows_np[perm], cols_np[perm]
    query_to_ab = np.stack([rows_np * 10 - 110, cols_np * 10 - 110], axis=1)

    out_ab = position_cnn_forward(position_cnn, H, W, weight, bias, query_to_ab)
    out_ab = jax.block_until_ready(out_ab)
    ref_ab = _reference_forward(position_cnn, H, W, weight, bias, query_to_ab)
    assert out_ab.shape == (B, area, C)
    assert jnp.allclose(out_ab, ref_ab, atol=1e-4, rtol=1e-4)

    print("KERNEL_OK")
</pallas_src>

<mosaic_0001>
module attributes {stable_mosaic.version = 11 : i64} {
  func.func @_dwconv3x3_kernel(%arg0: i32, %arg1: memref<2x16x512xf32, #tpu.memory_space<vmem>>, %arg2: memref<16x512xf32, #tpu.memory_space<vmem>>, %arg3: memref<2x16x512xf32, #tpu.memory_space<vmem>>) attributes {dimension_semantics = [#tpu.dimension_semantics<arbitrary>], iteration_bounds = array<i64: 1>, scalar_prefetch = 0 : i64, scratch_operands = 0 : i64, tpu.core_type = #tpu.core_type<tc>, window_params = [{pipeline_mode = #tpu.pipeline_mode<synchronous>, transform_indices = @transform_0, window_bounds = array<i64: 2, 16, 512>}, {pipeline_mode = #tpu.pipeline_mode<synchronous>, transform_indices = @transform_1, window_bounds = array<i64: 16, 512>}, {pipeline_mode = #tpu.pipeline_mode<synchronous>, transform_indices = @transform_2, window_bounds = array<i64: 2, 16, 512>}]} {
    %c0 = arith.constant 0 : index
    %c0_0 = arith.constant 0 : index
    %0 = vector.load %arg2[%c0, %c0_0] : memref<16x512xf32, #tpu.memory_space<vmem>>, vector<1x512xf32>
    %1 = vector.shape_cast %0 : vector<1x512xf32> to vector<512xf32>
    %c1 = arith.constant 1 : index
    %c0_1 = arith.constant 0 : index
    %2 = vector.load %arg2[%c1, %c0_1] : memref<16x512xf32, #tpu.memory_space<vmem>>, vector<1x512xf32>
    %3 = vector.shape_cast %2 : vector<1x512xf32> to vector<512xf32>
    %c2 = arith.constant 2 : index
    %c0_2 = arith.constant 0 : index
    %4 = vector.load %arg2[%c2, %c0_2] : memref<16x512xf32, #tpu.memory_space<vmem>>, vector<1x512xf32>
    %5 = vector.shape_cast %4 : vector<1x512xf32> to vector<512xf32>
    %c3 = arith.constant 3 : index
    %c0_3 = arith.constant 0 : index
    %6 = vector.load %arg2[%c3, %c0_3] : memref<16x512xf32, #tpu.memory_space<vmem>>, vector<1x512xf32>
    %7 = vector.shape_cast %6 : vector<1x512xf32> to vector<512xf32>
    %c4 = arith.constant 4 : index
    %c0_4 = arith.constant 0 : index
    %8 = vector.load %arg2[%c4, %c0_4] : memref<16x512xf32, #tpu.memory_space<vmem>>, vector<1x512xf32>
    %9 = vector.shape_cast %8 : vector<1x512xf32> to vector<512xf32>
    %c5 = arith.constant 5 : index
    %c0_5 = arith.constant 0 : index
    %10 = vector.load %arg2[%c5, %c0_5] : memref<16x512xf32, #tpu.memory_space<vmem>>, vector<1x512xf32>
    %11 = vector.shape_cast %10 : vector<1x512xf32> to vector<512xf32>
    %c6 = arith.constant 6 : index
    %c0_6 = arith.constant 0 : index
    %12 = vector.load %arg2[%c6, %c0_6] : memref<16x512xf32, #tpu.memory_space<vmem>>, vector<1x512xf32>
    %13 = vector.shape_cast %12 : vector<1x512xf32> to vector<512xf32>
    %c7 = arith.constant 7 : index
    %c0_7 = arith.constant 0 : index
    %14 = vector.load %arg2[%c7, %c0_7] : memref<16x512xf32, #tpu.memory_space<vmem>>, vector<1x512xf32>
    %15 = vector.shape_cast %14 : vector<1x512xf32> to vector<512xf32>
    %c8 = arith.constant 8 : index
    %c0_8 = arith.constant 0 : index
    %16 = vector.load %arg2[%c8, %c0_8] : memref<16x512xf32, #tpu.memory_space<vmem>>, vector<1x512xf32>
    %17 = vector.shape_cast %16 : vector<1x512xf32> to vector<512xf32>
    %c9 = arith.constant 9 : index
    %c0_9 = arith.constant 0 : index
    %18 = vector.load %arg2[%c9, %c0_9] : memref<16x512xf32, #tpu.memory_space<vmem>>, vector<1x512xf32>
    %19 = vector.shape_cast %18 : vector<1x512xf32> to vector<512xf32>
    %20 = tpu.iota {dimensions = array<i32: 0>} : vector<16x512xi32>
    %c0_i32 = arith.constant 0 : i32
    %21 = vector.broadcast %c0_i32 : i32 to vector<16x512xi32>
    %22 = arith.cmpi sgt, %20, %21 : vector<16x512xi32>
    %c15_i32 = arith.constant 15 : i32
    %23 = vector.broadcast %c15_i32 : i32 to vector<16x512xi32>
    %24 = arith.cmpi slt, %20, %23 : vector<16x512xi32>
    %c0_10 = arith.constant 0 : index
    %c0_11 = arith.constant 0 : index
    %c0_12 = arith.constant 0 : index
    %25 = vector.load %arg1[%c0_10, %c0_11, %c0_12] : memref<2x16x512xf32, #tpu.memory_space<vmem>>, vector<1x16x512xf32>
    %26 = vector.shape_cast %25 : vector<1x16x512xf32> to vector<16x512xf32>
    %c32_i32 = arith.constant 32 : i32
    %27 = tpu.dynamic_rotate %26 by %c32_i32 dim 1 : vector<16x512xf32>, i32 -> vector<16x512xf32>
    %c480_i32 = arith.constant 480 : i32
    %28 = tpu.dynamic_rotate %26 by %c480_i32 dim 1 : vector<16x512xf32>, i32 -> vector<16x512xf32>
    %29 = vector.shape_cast %1 : vector<512xf32> to vector<1x512xf32>
    %30 = vector.broadcast %29 : vector<1x512xf32> to vector<16x512xf32>
    %31 = arith.mulf %27, %30 : vector<16x512xf32>
    %32 = vector.shape_cast %3 : vector<512xf32> to vector<1x512xf32>
    %33 = vector.broadcast %32 : vector<1x512xf32> to vector<16x512xf32>
    %34 = arith.mulf %26, %33 : vector<16x512xf32>
    %35 = arith.addf %31, %34 : vector<16x512xf32>
    %36 = vector.shape_cast %5 : vector<512xf32> to vector<1x512xf32>
    %37 = vector.broadcast %36 : vector<1x512xf32> to vector<16x512xf32>
    %38 = arith.mulf %28, %37 : vector<16x512xf32>
    %39 = arith.addf %35, %38 : vector<16x512xf32>
    %40 = vector.shape_cast %7 : vector<512xf32> to vector<1x512xf32>
    %41 = vector.broadcast %40 : vector<1x512xf32> to vector<16x512xf32>
    %42 = arith.mulf %27, %41 : vector<16x512xf32>
    %43 = vector.shape_cast %9 : vector<512xf32> to vector<1x512xf32>
    %44 = vector.broadcast %43 : vector<1x512xf32> to vector<16x512xf32>
    %45 = arith.mulf %26, %44 : vector<16x512xf32>
    %46 = arith.addf %42, %45 : vector<16x512xf32>
    %47 = vector.shape_cast %11 : vector<512xf32> to vector<1x512xf32>
    %48 = vector.broadcast %47 : vector<1x512xf32> to vector<16x512xf32>
    %49 = arith.mulf %28, %48 : vector<16x512xf32>
    %50 = arith.addf %46, %49 : vector<16x512xf32>
    %51 = vector.shape_cast %13 : vector<512xf32> to vector<1x512xf32>
    %52 = vector.broadcast %51 : vector<1x512xf32> to vector<16x512xf32>
    %53 = arith.mulf %27, %52 : vector<16x512xf32>
    %54 = vector.shape_cast %15 : vector<512xf32> to vector<1x512xf32>
    %55 = vector.broadcast %54 : vector<1x512xf32> to vector<16x512xf32>
    %56 = arith.mulf %26, %55 : vector<16x512xf32>
    %57 = arith.addf %53, %56 : vector<16x512xf32>
    %58 = vector.shape_cast %17 : vector<512xf32> to vector<1x512xf32>
    %59 = vector.broadcast %58 : vector<1x512xf32> to vector<16x512xf32>
    %60 = arith.mulf %28, %59 : vector<16x512xf32>
    %61 = arith.addf %57, %60 : vector<16x512xf32>
    %62 = vector.shape_cast %19 : vector<512xf32> to vector<1x512xf32>
    %63 = vector.broadcast %62 : vector<1x512xf32> to vector<16x512xf32>
    %64 = arith.addf %50, %63 : vector<16x512xf32>
    %65 = arith.addf %64, %26 : vector<16x512xf32>
    %c1_i32 = arith.constant 1 : i32
    %66 = tpu.dynamic_rotate %39 by %c1_i32 dim 0 : vector<16x512xf32>, i32 -> vector<16x512xf32>
    %c15_i32_13 = arith.constant 15 : i32
    %67 = tpu.dynamic_rotate %61 by %c15_i32_13 dim 0 : vector<16x512xf32>, i32 -> vector<16x512xf32>
    %cst = arith.constant 0.000000e+00 : f32
    %68 = vector.broadcast %cst : f32 to vector<16x512xf32>
    %69 = arith.select %22, %66, %68 : vector<16x512xi1>, vector<16x512xf32>
    %70 = arith.addf %65, %69 : vector<16x512xf32>
    %cst_14 = arith.constant 0.000000e+00 : f32
    %71 = vector.broadcast %cst_14 : f32 to vector<16x512xf32>
    %72 = arith.select %24, %67, %71 : vector<16x512xi1>, vector<16x512xf32>
    %73 = arith.addf %70, %72 : vector<16x512xf32>
    %c0_15 = arith.constant 0 : index
    %c0_16 = arith.constant 0 : index
    %c0_17 = arith.constant 0 : index
    %74 = vector.load %arg3[%c0_15, %c0_16, %c0_17] : memref<2x16x512xf32, #tpu.memory_space<vmem>>, vector<1x16x512xf32>
    %75 = vector.shape_cast %74 : vector<1x16x512xf32> to vector<16x512xf32>
    %76 = vector.shape_cast %73 : vector<16x512xf32> to vector<1x16x512xf32>
    tpu.vector_store %arg3[%c0_15, %c0_16, %c0_17], %76 {strides = array<i32>} : memref<2x16x512xf32, #tpu.memory_space<vmem>>, vector<1x16x512xf32>,
    %c1_18 = arith.constant 1 : index
    %c0_19 = arith.constant 0 : index
    %c0_20 = arith.constant 0 : index
    %77 = vector.load %arg1[%c1_18, %c0_19, %c0_20] : memref<2x16x512xf32, #tpu.memory_space<vmem>>, vector<1x16x512xf32>
    %78 = vector.shape_cast %77 : vector<1x16x512xf32> to vector<16x512xf32>
    %c32_i32_21 = arith.constant 32 : i32
    %79 = tpu.dynamic_rotate %78 by %c32_i32_21 dim 1 : vector<16x512xf32>, i32 -> vector<16x512xf32>
    %c480_i32_22 = arith.constant 480 : i32
    %80 = tpu.dynamic_rotate %78 by %c480_i32_22 dim 1 : vector<16x512xf32>, i32 -> vector<16x512xf32>
    %81 = vector.shape_cast %1 : vector<512xf32> to vector<1x512xf32>
    %82 = vector.broadcast %81 : vector<1x512xf32> to vector<16x512xf32>
    %83 = arith.mulf %79, %82 : vector<16x512xf32>
    %84 = vector.shape_cast %3 : vector<512xf32> to vector<1x512xf32>
    %85 = vector.broadcast %84 : vector<1x512xf32> to vector<16x512xf32>
    %86 = arith.mulf %78, %85 : vector<16x512xf32>
    %87 = arith.addf %83, %86 : vector<16x512xf32>
    %88 = vector.shape_cast %5 : vector<512xf32> to vector<1x512xf32>
    %89 = vector.broadcast %88 : vector<1x512xf32> to vector<16x512xf32>
    %90 = arith.mulf %80, %89 : vector<16x512xf32>
    %91 = arith.addf %87, %90 : vector<16x512xf32>
    %92 = vector.shape_cast %7 : vector<512xf32> to vector<1x512xf32>
    %93 = vector.broadcast %92 : vector<1x512xf32> to vector<16x512xf32>
    %94 = arith.mulf %79, %93 : vector<16x512xf32>
    %95 = vector.shape_cast %9 : vector<512xf32> to vector<1x512xf32>
    %96 = vector.broadcast %95 : vector<1x512xf32> to vector<16x512xf32>
    %97 = arith.mulf %78, %96 : vector<16x512xf32>
    %98 = arith.addf %94, %97 : vector<16x512xf32>
    %99 = vector.shape_cast %11 : vector<512xf32> to vector<1x512xf32>
    %100 = vector.broadcast %99 : vector<1x512xf32> to vector<16x512xf32>
    %101 = arith.mulf %80, %100 : vector<16x512xf32>
    %102 = arith.addf %98, %101 : vector<16x512xf32>
    %103 = vector.shape_cast %13 : vector<512xf32> to vector<1x512xf32>
    %104 = vector.broadcast %103 : vector<1x512xf32> to vector<16x512xf32>
    %105 = arith.mulf %79, %104 : vector<16x512xf32>
    %106 = vector.shape_cast %15 : vector<512xf32> to vector<1x512xf32>
    %107 = vector.broadcast %106 : vector<1x512xf32> to vector<16x512xf32>
    %108 = arith.mulf %78, %107 : vector<16x512xf32>
    %109 = arith.addf %105, %108 : vector<16x512xf32>
    %110 = vector.shape_cast %17 : vector<512xf32> to vector<1x512xf32>
    %111 = vector.broadcast %110 : vector<1x512xf32> to vector<16x512xf32>
    %112 = arith.mulf %80, %111 : vector<16x512xf32>
    %113 = arith.addf %109, %112 : vector<16x512xf32>
    %114 = vector.shape_cast %19 : vector<512xf32> to vector<1x512xf32>
    %115 = vector.broadcast %114 : vector<1x512xf32> to vector<16x512xf32>
    %116 = arith.addf %102, %115 : vector<16x512xf32>
    %117 = arith.addf %116, %78 : vector<16x512xf32>
    %c1_i32_23 = arith.constant 1 : i32
    %118 = tpu.dynamic_rotate %91 by %c1_i32_23 dim 0 : vector<16x512xf32>, i32 -> vector<16x512xf32>
    %c15_i32_24 = arith.constant 15 : i32
    %119 = tpu.dynamic_rotate %113 by %c15_i32_24 dim 0 : vector<16x512xf32>, i32 -> vector<16x512xf32>
    %cst_25 = arith.constant 0.000000e+00 : f32
    %120 = vector.broadcast %cst_25 : f32 to vector<16x512xf32>
    %121 = arith.select %22, %118, %120 : vector<16x512xi1>, vector<16x512xf32>
    %122 = arith.addf %117, %121 : vector<16x512xf32>
    %cst_26 = arith.constant 0.000000e+00 : f32
    %123 = vector.broadcast %cst_26 : f32 to vector<16x512xf32>
    %124 = arith.select %24, %119, %123 : vector<16x512xi1>, vector<16x512xf32>
    %125 = arith.addf %122, %124 : vector<16x512xf32>
    %c1_27 = arith.constant 1 : index
    %c0_28 = arith.constant 0 : index
    %c0_29 = arith.constant 0 : index
    %126 = vector.load %arg3[%c1_27, %c0_28, %c0_29] : memref<2x16x512xf32, #tpu.memory_space<vmem>>, vector<1x16x512xf32>
    %127 = vector.shape_cast %126 : vector<1x16x512xf32> to vector<16x512xf32>
    %128 = vector.shape_cast %125 : vector<16x512xf32> to vector<1x16x512xf32>
    tpu.vector_store %arg3[%c1_27, %c0_28, %c0_29], %128 {strides = array<i32>} : memref<2x16x512xf32, #tpu.memory_space<vmem>>, vector<1x16x512xf32>,
    return
  }
  func.func @transform_0(%arg0: i32) -> (i32, i32, i32) {
    %c0_i32 = arith.constant 0 : i32
    %c0_i32_0 = arith.constant 0 : i32
    %c0_i32_1 = arith.constant 0 : i32
    %c0_i32_2 = arith.constant 0 : i32
    return %c0_i32, %c0_i32_0, %c0_i32_1 : i32, i32, i32
  }
  func.func @transform_1(%arg0: i32) -> (i32, i32) {
    %c0_i32 = arith.constant 0 : i32
    %c0_i32_0 = arith.constant 0 : i32
    %c0_i32_1 = arith.constant 0 : i32
    return %c0_i32, %c0_i32_0 : i32, i32
  }
  func.func @transform_2(%arg0: i32) -> (i32, i32, i32) {
    %c0_i32 = arith.constant 0 : i32
    %c0_i32_0 = arith.constant 0 : i32
    %c0_i32_1 = arith.constant 0 : i32
    %c0_i32_2 = arith.constant 0 : i32
    return %c0_i32, %c0_i32_0, %c0_i32_1 : i32, i32, i32
  }
}

</mosaic_0001>

<llo_original>
// kernel: tpu_custom_call.1
$region0: #{tpu_custom_call.1}
  #allocation0 [shape = 'u32[]', space=smem, size = 0x4, offset = 0x4, fixed_abs, tag = 'smem constant byte address 0x4 - core index']
  #allocation1 [shape = 'u32[144,128]{1,0:T(1,128)}', space=vmem, size = 0x12000, scoped, tag = 'internal scratch']
  %s0 = inlined_call_operand.hbm [shape: f32[2,16,512], index: 0, kind: input, shape index: {}]
  %s1 = inlined_call_operand.hbm [shape: f32[16,512], index: 1, kind: input, shape index: {}]
  %s2 = inlined_call_operand.hbm [shape: f32[2,16,512], index: 2, kind: output, shape index: {}]
  %s3 = sld [smem:[#allocation0]]
  $region26: #{tpu_custom_call.1} parent=0
    _
  %s5 = ssub.s32 1, %s3
  %s6 = scalar_select 0, %s5, %s3
  $region1: #{tpu_custom_call.1} parent=0
    #allocation2 [shape = 'u8[65536]{0}', space=vmem, size = 0x10000, scoped, tag = 'input window, operand 0, single buffered']
    #allocation3 [shape = 's32[1]{0}', space=sflag, size = 0x4, scoped, tag = 'scoped memory for tpu_custom_call.1']
    #allocation4 [shape = 's32[1]{0}', space=sflag, size = 0x4, scoped, tag = 'scoped memory for tpu_custom_call.1']
    #allocation5 [shape = 'u8[32768]{0}', space=vmem, size = 0x8000, scoped, tag = 'input window, operand 1, single buffered']
    #allocation6 [shape = 's32[1]{0}', space=sflag, size = 0x4, scoped, tag = 'scoped memory for tpu_custom_call.1']
    #allocation7 [shape = 'u8[65536]{0}', space=vmem, size = 0x10000, scoped, tag = 'output window, operand 0, single buffered']
    %7 = vsyncpa [#allocation3], 0
    %8 = vsyncpa [#allocation6], 0
    %9 = vsyncpa [#allocation4], 0
    // Predicated region
    $region2: #{tpu_custom_call.1} parent=1 // pred_check
      _
    $region3: #{tpu_custom_call.1} parent=1 // pred_check_branch
      %11 = sbr.rel (0) target = $region5
    $region4: #{tpu_custom_call.1} parent=1 // pred_region
      %s13 = ssub.s32 2048, 2048
      %14 = vsyncadd [#allocation3], %s13
      %s15 = sshll.u32 [#allocation2], 4
      %s16 = int_to_ptr.vmem [resolvable:$true] %s15
      %21 = dma.hbm_to_vmem [thread:$0]  %s0, 2048, %s16, [#allocation3], 512, 512, 32
    $region5: #{tpu_custom_call.1} parent=1 // pred_fallthru
      _
    // Predicated region
    $region6: #{tpu_custom_call.1} parent=1 // pred_check
      _
    $region7: #{tpu_custom_call.1} parent=1 // pred_check_branch
      %23 = sbr.rel (0) target = $region9
    $region8: #{tpu_custom_call.1} parent=1 // pred_region
      %s25 = ssub.s32 1024, 1024
      %26 = vsyncadd [#allocation6], %s25
      %s27 = sshll.u32 [#allocation5], 4
      %s28 = int_to_ptr.vmem [resolvable:$true] %s27
      %33 = dma.hbm_to_vmem [thread:$0]  %s1, 1024, %s28, [#allocation6], 512, 512, 32
    $region9: #{tpu_custom_call.1} parent=1 // pred_fallthru
      _
    // Predicated region
    $region10: #{tpu_custom_call.1} parent=1 // pred_check
      _
    $region11: #{tpu_custom_call.1} parent=1 // pred_check_branch
      %35 = sbr.rel (0) target = $region13
    $region12: #{tpu_custom_call.1} parent=1 // pred_region
      %36 = dma.done [#allocation3], 2048
    $region13: #{tpu_custom_call.1} parent=1 // pred_fallthru
      _
    // Predicated region
    $region14: #{tpu_custom_call.1} parent=1 // pred_check
      _
    $region15: #{tpu_custom_call.1} parent=1 // pred_check_branch
      %38 = sbr.rel (0) target = $region17
    $region16: #{tpu_custom_call.1} parent=1 // pred_region
      %39 = dma.done [#allocation6], 1024
    $region17: #{tpu_custom_call.1} parent=1 // pred_fallthru
      _
    %v40 = vld [vmem:[#allocation5] ss:$8 sm:$0xf]
    %s41 = scalar_lea.vmem [#allocation5], 1
    %v42 = vld [vmem:[%s41] ss:$8 sm:$0xf]
    %s43 = scalar_lea.vmem [#allocation5], 2
    %v44 = vld [vmem:[%s43] ss:$8 sm:$0xf]
    %s45 = scalar_lea.vmem [#allocation5], 3
    %v46 = vld [vmem:[%s45] ss:$8 sm:$0xf]
    %s47 = scalar_lea.vmem [#allocation5], 4
    %v48 = vld [vmem:[%s47] ss:$8 sm:$0xf]
    %s49 = scalar_lea.vmem [#allocation5], 5
    %v50 = vld [vmem:[%s49] ss:$8 sm:$0xf]
    %s51 = scalar_lea.vmem [#allocation5], 6
    %v52 = vld [vmem:[%s51] ss:$8 sm:$0xf]
    %s53 = scalar_lea.vmem [#allocation5], 7
    %v54 = vld [vmem:[%s53] ss:$8 sm:$0xf]
    %s55 = scalar_lea.vmem [#allocation5], 32
    %v56 = vld [vmem:[%s55] ss:$8 sm:$0xf]
    %s57 = scalar_lea.vmem [#allocation5], 33
    %v58 = vld [vmem:[%s57] ss:$8 sm:$0xf]
    %v59 = vlaneseq
    %v60 = vshrl.u32 %v59, 7
    %v61 = vadd.s32 %v60, 8
    %vm62 = vcmp.gt.s32.totalorder %v60, 0
    %vm63 = vcmp.gt.s32.totalorder %v61, 0
    %vm64 = vcmp.lt.s32.totalorder %v60, 15
    %vm65 = vcmp.lt.s32.totalorder %v61, 15
    %v66 = vld [vmem:[#allocation2] sm:$0xff]
    %v67 = vld [vmem:[#allocation2 + $0x8] sm:$0xff]
    %v68 = vld [vmem:[#allocation2 + $0x10] sm:$0xff]
    %v69 = vld [vmem:[#allocation2 + $0x18] sm:$0xff]
    %v70 = vld [vmem:[#allocation2 + $0x20] sm:$0xff]
    %v71 = vld [vmem:[#allocation2 + $0x28] sm:$0xff]
    %v72 = vld [vmem:[#allocation2 + $0x30] sm:$0xff]
    %v73 = vld [vmem:[#allocation2 + $0x38] sm:$0xff]
    %74 = vrot.lane.b32.xlu0 %v66, 32
    %v75 = vpop.permute.xlu0 %74
    %76 = vrot.lane.b32.xlu0 %v70, 32
    %v77 = vpop.permute.xlu0 %76
    %78 = vrot.lane.b32.xlu0 %v67, 32
    %v79 = vpop.permute.xlu0 %78
    %80 = vrot.lane.b32.xlu0 %v71, 32
    %v81 = vpop.permute.xlu0 %80
    %82 = vrot.lane.b32.xlu0 %v68, 32
    %v83 = vpop.permute.xlu0 %82
    %84 = vrot.lane.b32.xlu0 %v72, 32
    %v85 = vpop.permute.xlu0 %84
    %86 = vrot.lane.b32.xlu0 %v69, 32
    %v87 = vpop.permute.xlu0 %86
    %88 = vrot.lane.b32.xlu0 %v73, 32
    %v89 = vpop.permute.xlu0 %88
    %v90 = vlaneseq
    %v91 = vand.u32 %v90, 127
    %vm92 = vcmp.lt.s32.totalorder %v91, 32
    %v93 = vsel %vm92, %v83, %v87
    %v94 = vsel %vm92, %v85, %v89
    %v95 = vsel %vm92, %v79, %v83
    %v96 = vsel %vm92, %v81, %v85
    %v97 = vsel %vm92, %v75, %v79
    %v98 = vsel %vm92, %v77, %v81
    %v99 = vsel %vm92, %v87, %v75
    %v100 = vsel %vm92, %v89, %v77
    %101 = vrot.lane.b32.xlu0 %v66, 96
    %v102 = vpop.permute.xlu0 %101
    %103 = vrot.lane.b32.xlu0 %v70, 96
    %v104 = vpop.permute.xlu0 %103
    %105 = vrot.lane.b32.xlu0 %v67, 96
    %v106 = vpop.permute.xlu0 %105
    %107 = vrot.lane.b32.xlu0 %v71, 96
    %v108 = vpop.permute.xlu0 %107
    %109 = vrot.lane.b32.xlu0 %v68, 96
    %v110 = vpop.permute.xlu0 %109
    %111 = vrot.lane.b32.xlu0 %v72, 96
    %v112 = vpop.permute.xlu0 %111
    %113 = vrot.lane.b32.xlu0 %v69, 96
    %v114 = vpop.permute.xlu0 %113
    %115 = vrot.lane.b32.xlu0 %v73, 96
    %v116 = vpop.permute.xlu0 %115
    %vm117 = vcmp.lt.s32.totalorder %v91, 96
    %v118 = vsel %vm117, %v110, %v114
    %v119 = vsel %vm117, %v112, %v116
    %v120 = vsel %vm117, %v106, %v110
    %v121 = vsel %vm117, %v108, %v112
    %v122 = vsel %vm117, %v102, %v106
    %v123 = vsel %vm117, %v104, %v108
    %v124 = vsel %vm117, %v114, %v102
    %v125 = vsel %vm117, %v116, %v104
    %v127 = vlaneseq
    %v128 = vshrl.u32 %v127, 7
    %v129 = vsub.s32 0, %v128
    %v130 = vrot.slane %v40, %v129
    %v131 = vlaneseq
    %v132 = vshrl.u32 %v131, 7
    %v133 = vsub.s32 1, %v132
    %v134 = vrot.slane %v40, %v133
    %v135 = vlaneseq
    %v136 = vshrl.u32 %v135, 7
    %v137 = vsub.s32 2, %v136
    %v138 = vrot.slane %v40, %v137
    %v139 = vlaneseq
    %v140 = vshrl.u32 %v139, 7
    %v141 = vsub.s32 3, %v140
    %v142 = vrot.slane %v40, %v141
    %v147 = vmul.f32 %v99, %v130
    %v148 = vmul.f32 %v97, %v134
    %v149 = vmul.f32 %v95, %v138
    %v150 = vmul.f32 %v93, %v142
    %v151 = vmul.f32 %v100, %v130
    %v152 = vmul.f32 %v98, %v134
    %v153 = vmul.f32 %v96, %v138
    %v154 = vmul.f32 %v94, %v142
    %v156 = vlaneseq
    %v157 = vshrl.u32 %v156, 7
    %v158 = vsub.s32 0, %v157
    %v159 = vrot.slane %v42, %v158
    %v160 = vlaneseq
    %v161 = vshrl.u32 %v160, 7
    %v162 = vsub.s32 1, %v161
    %v163 = vrot.slane %v42, %v162
    %v164 = vlaneseq
    %v165 = vshrl.u32 %v164, 7
    %v166 = vsub.s32 2, %v165
    %v167 = vrot.slane %v42, %v166
    %v168 = vlaneseq
    %v169 = vshrl.u32 %v168, 7
    %v170 = vsub.s32 3, %v169
    %v171 = vrot.slane %v42, %v170
    %v176 = vmul.f32 %v66, %v159
    %v177 = vmul.f32 %v67, %v163
    %v178 = vmul.f32 %v68, %v167
    %v179 = vmul.f32 %v69, %v171
    %v180 = vmul.f32 %v70, %v159
    %v181 = vmul.f32 %v71, %v163
    %v182 = vmul.f32 %v72, %v167
    %v183 = vmul.f32 %v73, %v171
    %v184 = vadd.f32 %v147, %v176
    %v185 = vadd.f32 %v148, %v177
    %v186 = vadd.f32 %v149, %v178
    %v187 = vadd.f32 %v150, %v179
    %v188 = vadd.f32 %v151, %v180
    %v189 = vadd.f32 %v152, %v181
    %v190 = vadd.f32 %v153, %v182
    %v191 = vadd.f32 %v154, %v183
    %v193 = vlaneseq
    %v194 = vshrl.u32 %v193, 7
    %v195 = vsub.s32 0, %v194
    %v196 = vrot.slane %v44, %v195
    %v197 = vlaneseq
    %v198 = vshrl.u32 %v197, 7
    %v199 = vsub.s32 1, %v198
    %v200 = vrot.slane %v44, %v199
    %v201 = vlaneseq
    %v202 = vshrl.u32 %v201, 7
    %v203 = vsub.s32 2, %v202
    %v204 = vrot.slane %v44, %v203
    %v205 = vlaneseq
    %v206 = vshrl.u32 %v205, 7
    %v207 = vsub.s32 3, %v206
    %v208 = vrot.slane %v44, %v207
    %v213 = vmul.f32 %v122, %v196
    %v214 = vmul.f32 %v120, %v200
    %v215 = vmul.f32 %v118, %v204
    %v216 = vmul.f32 %v124, %v208
    %v217 = vmul.f32 %v123, %v196
    %v218 = vmul.f32 %v121, %v200
    %v219 = vmul.f32 %v119, %v204
    %v220 = vmul.f32 %v125, %v208
    %v221 = vadd.f32 %v184, %v213
    %v222 = vadd.f32 %v185, %v214
    %v223 = vadd.f32 %v186, %v215
    %v224 = vadd.f32 %v187, %v216
    %v225 = vadd.f32 %v188, %v217
    %v226 = vadd.f32 %v189, %v218
    %v227 = vadd.f32 %v190, %v219
    %v228 = vadd.f32 %v191, %v220
    %v230 = vlaneseq
    %v231 = vshrl.u32 %v230, 7
    %v232 = vsub.s32 0, %v231
    %v233 = vrot.slane %v46, %v232
    %v234 = vlaneseq
    %v235 = vshrl.u32 %v234, 7
    %v236 = vsub.s32 1, %v235
    %v237 = vrot.slane %v46, %v236
    %v238 = vlaneseq
    %v239 = vshrl.u32 %v238, 7
    %v240 = vsub.s32 2, %v239
    %v241 = vrot.slane %v46, %v240
    %v242 = vlaneseq
    %v243 = vshrl.u32 %v242, 7
    %v244 = vsub.s32 3, %v243
    %v245 = vrot.slane %v46, %v244
    %v250 = vmul.f32 %v99, %v233
    %v251 = vmul.f32 %v97, %v237
    %v252 = vmul.f32 %v95, %v241
    %v253 = vmul.f32 %v93, %v245
    %v254 = vmul.f32 %v100, %v233
    %v255 = vmul.f32 %v98, %v237
    %v256 = vmul.f32 %v96, %v241
    %v257 = vmul.f32 %v94, %v245
    %v259 = vlaneseq
    %v260 = vshrl.u32 %v259, 7
    %v261 = vsub.s32 0, %v260
    %v262 = vrot.slane %v48, %v261
    %v263 = vlaneseq
    %v264 = vshrl.u32 %v263, 7
    %v265 = vsub.s32 1, %v264
    %v266 = vrot.slane %v48, %v265
    %v267 = vlaneseq
    %v268 = vshrl.u32 %v267, 7
    %v269 = vsub.s32 2, %v268
    %v270 = vrot.slane %v48, %v269
    %v271 = vlaneseq
    %v272 = vshrl.u32 %v271, 7
    %v273 = vsub.s32 3, %v272
    %v274 = vrot.slane %v48, %v273
    %v279 = vmul.f32 %v66, %v262
    %v280 = vmul.f32 %v67, %v266
    %v281 = vmul.f32 %v68, %v270
    %v282 = vmul.f32 %v69, %v274
    %v283 = vmul.f32 %v70, %v262
    %v284 = vmul.f32 %v71, %v266
    %v285 = vmul.f32 %v72, %v270
    %v286 = vmul.f32 %v73, %v274
    %v287 = vadd.f32 %v250, %v279
    %v288 = vadd.f32 %v251, %v280
    %v289 = vadd.f32 %v252, %v281
    %v290 = vadd.f32 %v253, %v282
    %v291 = vadd.f32 %v254, %v283
    %v292 = vadd.f32 %v255, %v284
    %v293 = vadd.f32 %v256, %v285
    %v294 = vadd.f32 %v257, %v286
    %v296 = vlaneseq
    %v297 = vshrl.u32 %v296, 7
    %v298 = vsub.s32 0, %v297
    %v299 = vrot.slane %v50, %v298
    %v300 = vlaneseq
    %v301 = vshrl.u32 %v300, 7
    %v302 = vsub.s32 1, %v301
    %v303 = vrot.slane %v50, %v302
    %v304 = vlaneseq
    %v305 = vshrl.u32 %v304, 7
    %v306 = vsub.s32 2, %v305
    %v307 = vrot.slane %v50, %v306
    %v308 = vlaneseq
    %v309 = vshrl.u32 %v308, 7
    %v310 = vsub.s32 3, %v309
    %v311 = vrot.slane %v50, %v310
    %v316 = vmul.f32 %v122, %v299
    %v317 = vmul.f32 %v120, %v303
    %v318 = vmul.f32 %v118, %v307
    %v319 = vmul.f32 %v124, %v311
    %v320 = vmul.f32 %v123, %v299
    %v321 = vmul.f32 %v121, %v303
    %v322 = vmul.f32 %v119, %v307
    %v323 = vmul.f32 %v125, %v311
    %v324 = vadd.f32 %v287, %v316
    %v325 = vadd.f32 %v288, %v317
    %v326 = vadd.f32 %v289, %v318
    %v327 = vadd.f32 %v290, %v319
    %v328 = vadd.f32 %v291, %v320
    %v329 = vadd.f32 %v292, %v321
    %v330 = vadd.f32 %v293, %v322
    %v331 = vadd.f32 %v294, %v323
    %v333 = vlaneseq
    %v334 = vshrl.u32 %v333, 7
    %v335 = vsub.s32 0, %v334
    %v336 = vrot.slane %v52, %v335
    %v337 = vlaneseq
    %v338 = vshrl.u32 %v337, 7
    %v339 = vsub.s32 1, %v338
    %v340 = vrot.slane %v52, %v339
    %v341 = vlaneseq
    %v342 = vshrl.u32 %v341, 7
    %v343 = vsub.s32 2, %v342
    %v344 = vrot.slane %v52, %v343
    %v345 = vlaneseq
    %v346 = vshrl.u32 %v345, 7
    %v347 = vsub.s32 3, %v346
    %v348 = vrot.slane %v52, %v347
    %v353 = vmul.f32 %v99, %v336
    %v354 = vmul.f32 %v97, %v340
    %v355 = vmul.f32 %v95, %v344
    %v356 = vmul.f32 %v93, %v348
    %v357 = vmul.f32 %v100, %v336
    %v358 = vmul.f32 %v98, %v340
    %v359 = vmul.f32 %v96, %v344
    %v360 = vmul.f32 %v94, %v348
    %v362 = vlaneseq
    %v363 = vshrl.u32 %v362, 7
    %v364 = vsub.s32 0, %v363
    %v365 = vrot.slane %v54, %v364
    %v366 = vlaneseq
    %v367 = vshrl.u32 %v366, 7
    %v368 = vsub.s32 1, %v367
    %v369 = vrot.slane %v54, %v368
    %v370 = vlaneseq
    %v371 = vshrl.u32 %v370, 7
    %v372 = vsub.s32 2, %v371
    %v373 = vrot.slane %v54, %v372
    %v374 = vlaneseq
    %v375 = vshrl.u32 %v374, 7
    %v376 = vsub.s32 3, %v375
    %v377 = vrot.slane %v54, %v376
    %v382 = vmul.f32 %v66, %v365
    %v383 = vmul.f32 %v67, %v369
    %v384 = vmul.f32 %v68, %v373
    %v385 = vmul.f32 %v69, %v377
    %v386 = vmul.f32 %v70, %v365
    %v387 = vmul.f32 %v71, %v369
    %v388 = vmul.f32 %v72, %v373
    %v389 = vmul.f32 %v73, %v377
    %v390 = vadd.f32 %v353, %v382
    %v391 = vadd.f32 %v354, %v383
    %v392 = vadd.f32 %v355, %v384
    %v393 = vadd.f32 %v356, %v385
    %v394 = vadd.f32 %v357, %v386
    %v395 = vadd.f32 %v358, %v387
    %v396 = vadd.f32 %v359, %v388
    %v397 = vadd.f32 %v360, %v389
    %v399 = vlaneseq
    %v400 = vshrl.u32 %v399, 7
    %v401 = vsub.s32 0, %v400
    %v402 = vrot.slane %v56, %v401
    %v403 = vlaneseq
    %v404 = vshrl.u32 %v403, 7
    %v405 = vsub.s32 1, %v404
    %v406 = vrot.slane %v56, %v405
    %v407 = vlaneseq
    %v408 = vshrl.u32 %v407, 7
    %v409 = vsub.s32 2, %v408
    %v410 = vrot.slane %v56, %v409
    %v411 = vlaneseq
    %v412 = vshrl.u32 %v411, 7
    %v413 = vsub.s32 3, %v412
    %v414 = vrot.slane %v56, %v413
    %v419 = vmul.f32 %v122, %v402
    %v420 = vmul.f32 %v120, %v406
    %v421 = vmul.f32 %v118, %v410
    %v422 = vmul.f32 %v124, %v414
    %v423 = vmul.f32 %v123, %v402
    %v424 = vmul.f32 %v121, %v406
    %v425 = vmul.f32 %v119, %v410
    %v426 = vmul.f32 %v125, %v414
    %v427 = vadd.f32 %v390, %v419
    %v428 = vadd.f32 %v391, %v420
    %v429 = vadd.f32 %v392, %v421
    %v430 = vadd.f32 %v393, %v422
    %v431 = vadd.f32 %v394, %v423
    %v432 = vadd.f32 %v395, %v424
    %v433 = vadd.f32 %v396, %v425
    %v434 = vadd.f32 %v397, %v426
    %v436 = vlaneseq
    %v437 = vshrl.u32 %v436, 7
    %v438 = vsub.s32 0, %v437
    %v439 = vrot.slane %v58, %v438
    %v440 = vlaneseq
    %v441 = vshrl.u32 %v440, 7
    %v442 = vsub.s32 1, %v441
    %v443 = vrot.slane %v58, %v442
    %v444 = vlaneseq
    %v445 = vshrl.u32 %v444, 7
    %v446 = vsub.s32 2, %v445
    %v447 = vrot.slane %v58, %v446
    %v448 = vlaneseq
    %v449 = vshrl.u32 %v448, 7
    %v450 = vsub.s32 3, %v449
    %v451 = vrot.slane %v58, %v450
    %v456 = vadd.f32 %v324, %v439
    %v457 = vadd.f32 %v325, %v443
    %v458 = vadd.f32 %v326, %v447
    %v459 = vadd.f32 %v327, %v451
    %v460 = vadd.f32 %v328, %v439
    %v461 = vadd.f32 %v329, %v443
    %v462 = vadd.f32 %v330, %v447
    %v463 = vadd.f32 %v331, %v451
    %v464 = vadd.f32 %v456, %v66
    %v465 = vadd.f32 %v457, %v67
    %v466 = vadd.f32 %v458, %v68
    %v467 = vadd.f32 %v459, %v69
    %v468 = vadd.f32 %v460, %v70
    %v469 = vadd.f32 %v461, %v71
    %v470 = vadd.f32 %v462, %v72
    %v471 = vadd.f32 %v463, %v73
    %v472 = vrot.slane %v221, 7
    %v473 = vrot.slane %v222, 7
    %v474 = vrot.slane %v223, 7
    %v475 = vrot.slane %v224, 7
    %v476 = vrot.slane %v225, 7
    %v477 = vrot.slane %v226, 7
    %v478 = vrot.slane %v227, 7
    %v479 = vrot.slane %v228, 7
    %vm480 = vcmp.lt.s32.totalorder %v60, 1
    %v481 = vsel %vm480, %v472, %v476
    %v482 = vsel %vm480, %v473, %v477
    %v483 = vsel %vm480, %v474, %v478
    %v484 = vsel %vm480, %v475, %v479
    %v485 = vsel %vm480, %v476, %v472
    %v486 = vsel %vm480, %v477, %v473
    %v487 = vsel %vm480, %v478, %v474
    %v488 = vsel %vm480, %v479, %v475
    %v489 = vrot.slane %v427, 1
    %v490 = vrot.slane %v428, 1
    %v491 = vrot.slane %v429, 1
    %v492 = vrot.slane %v430, 1
    %v493 = vrot.slane %v431, 1
    %v494 = vrot.slane %v432, 1
    %v495 = vrot.slane %v433, 1
    %v496 = vrot.slane %v434, 1
    %vm497 = vcmp.lt.s32.totalorder %v60, 7
    %v498 = vsel %vm497, %v489, %v493
    %v499 = vsel %vm497, %v490, %v494
    %v500 = vsel %vm497, %v491, %v495
    %v501 = vsel %vm497, %v492, %v496
    %v502 = vsel %vm497, %v493, %v489
    %v503 = vsel %vm497, %v494, %v490
    %v504 = vsel %vm497, %v495, %v491
    %v505 = vsel %vm497, %v496, %v492
    %v506 = vsel %vm62, %v485, 0.0
    %v507 = vsel %vm62, %v486, 0.0
    %v508 = vsel %vm62, %v487, 0.0
    %v509 = vsel %vm62, %v488, 0.0
    %v510 = vsel %vm63, %v481, 0.0
    %v511 = vsel %vm63, %v482, 0.0
    %v512 = vsel %vm63, %v483, 0.0
    %v513 = vsel %vm63, %v484, 0.0
    %v514 = vadd.f32 %v464, %v506
    %v515 = vadd.f32 %v465, %v507
    %v516 = vadd.f32 %v466, %v508
    %v517 = vadd.f32 %v467, %v509
    %v518 = vadd.f32 %v468, %v510
    %v519 = vadd.f32 %v469, %v511
    %v520 = vadd.f32 %v470, %v512
    %v521 = vadd.f32 %v471, %v513
    %v522 = vsel %vm64, %v498, 0.0
    %v523 = vsel %vm64, %v499, 0.0
    %v524 = vsel %vm64, %v500, 0.0
    %v525 = vsel %vm64, %v501, 0.0
    %v526 = vsel %vm65, %v502, 0.0
    %v527 = vsel %vm65, %v503, 0.0
    %v528 = vsel %vm65, %v504, 0.0
    %v529 = vsel %vm65, %v505, 0.0
    %v530 = vadd.f32 %v514, %v522
    %v531 = vadd.f32 %v515, %v523
    %v532 = vadd.f32 %v516, %v524
    %v533 = vadd.f32 %v517, %v525
    %v534 = vadd.f32 %v518, %v526
    %v535 = vadd.f32 %v519, %v527
    %v536 = vadd.f32 %v520, %v528
    %v537 = vadd.f32 %v521, %v529
    %538 = vst [vmem:[#allocation7] sm:$0xff] %v530
    %539 = vst [vmem:[#allocation7 + $0x8] sm:$0xff] %v531
    %540 = vst [vmem:[#allocation7 + $0x10] sm:$0xff] %v532
    %541 = vst [vmem:[#allocation7 + $0x18] sm:$0xff] %v533
    %542 = vst [vmem:[#allocation7 + $0x20] sm:$0xff] %v534
    %543 = vst [vmem:[#allocation7 + $0x28] sm:$0xff] %v535
    %544 = vst [vmem:[#allocation7 + $0x30] sm:$0xff] %v536
    %545 = vst [vmem:[#allocation7 + $0x38] sm:$0xff] %v537
    %s546 = scalar_lea.vmem [#allocation2], 64
    %v547 = vld [vmem:[%s546] sm:$0xff]
    %v548 = vld [vmem:[%s546 + $0x8] sm:$0xff]
    %v549 = vld [vmem:[%s546 + $0x10] sm:$0xff]
    %v550 = vld [vmem:[%s546 + $0x18] sm:$0xff]
    %v551 = vld [vmem:[%s546 + $0x20] sm:$0xff]
    %v552 = vld [vmem:[%s546 + $0x28] sm:$0xff]
    %v553 = vld [vmem:[%s546 + $0x30] sm:$0xff]
    %v554 = vld [vmem:[%s546 + $0x38] sm:$0xff]
    %555 = vrot.lane.b32.xlu0 %v547, 32
    %v556 = vpop.permute.xlu0 %555
    %557 = vrot.lane.b32.xlu0 %v551, 32
    %v558 = vpop.permute.xlu0 %557
    %559 = vrot.lane.b32.xlu0 %v548, 32
    %v560 = vpop.permute.xlu0 %559
    %561 = vrot.lane.b32.xlu0 %v552, 32
    %v562 = vpop.permute.xlu0 %561
    %563 = vrot.lane.b32.xlu0 %v549, 32
    %v564 = vpop.permute.xlu0 %563
    %565 = vrot.lane.b32.xlu0 %v553, 32
    %v566 = vpop.permute.xlu0 %565
    %567 = vrot.lane.b32.xlu0 %v550, 32
    %v568 = vpop.permute.xlu0 %567
    %569 = vrot.lane.b32.xlu0 %v554, 32
    %v570 = vpop.permute.xlu0 %569
    %v571 = vsel %vm92, %v564, %v568
    %v572 = vsel %vm92, %v566, %v570
    %v573 = vsel %vm92, %v560, %v564
    %v574 = vsel %vm92, %v562, %v566
    %v575 = vsel %vm92, %v556, %v560
    %v576 = vsel %vm92, %v558, %v562
    %v577 = vsel %vm92, %v568, %v556
    %v578 = vsel %vm92, %v570, %v558
    %579 = vrot.lane.b32.xlu0 %v547, 96
    %v580 = vpop.permute.xlu0 %579
    %581 = vrot.lane.b32.xlu0 %v551, 96
    %v582 = vpop.permute.xlu0 %581
    %583 = vrot.lane.b32.xlu0 %v548, 96
    %v584 = vpop.permute.xlu0 %583
    %585 = vrot.lane.b32.xlu0 %v552, 96
    %v586 = vpop.permute.xlu0 %585
    %587 = vrot.lane.b32.xlu0 %v549, 96
    %v588 = vpop.permute.xlu0 %587
    %589 = vrot.lane.b32.xlu0 %v553, 96
    %v590 = vpop.permute.xlu0 %589
    %591 = vrot.lane.b32.xlu0 %v550, 96
    %v592 = vpop.permute.xlu0 %591
    %593 = vrot.lane.b32.xlu0 %v554, 96
    %v594 = vpop.permute.xlu0 %593
    %v595 = vsel %vm117, %v588, %v592
    %v596 = vsel %vm117, %v590, %v594
    %v597 = vsel %vm117, %v584, %v588
    %v598 = vsel %vm117, %v586, %v590
    %v599 = vsel %vm117, %v580, %v584
    %v600 = vsel %vm117, %v582, %v586
    %v601 = vsel %vm117, %v592, %v580
    %v602 = vsel %vm117, %v594, %v582
    %v603 = vmul.f32 %v577, %v130
    %v604 = vmul.f32 %v575, %v134
    %v605 = vmul.f32 %v573, %v138
    %v606 = vmul.f32 %v571, %v142
    %v607 = vmul.f32 %v578, %v130
    %v608 = vmul.f32 %v576, %v134
    %v609 = vmul.f32 %v574, %v138
    %v610 = vmul.f32 %v572, %v142
    %v611 = vmul.f32 %v547, %v159
    %v612 = vmul.f32 %v548, %v163
    %v613 = vmul.f32 %v549, %v167
    %v614 = vmul.f32 %v550, %v171
    %v615 = vmul.f32 %v551, %v159
    %v616 = vmul.f32 %v552, %v163
    %v617 = vmul.f32 %v553, %v167
    %v618 = vmul.f32 %v554, %v171
    %v619 = vadd.f32 %v603, %v611
    %v620 = vadd.f32 %v604, %v612
    %v621 = vadd.f32 %v605, %v613
    %v622 = vadd.f32 %v606, %v614
    %v623 = vadd.f32 %v607, %v615
    %v624 = vadd.f32 %v608, %v616
    %v625 = vadd.f32 %v609, %v617
    %v626 = vadd.f32 %v610, %v618
    %v627 = vmul.f32 %v599, %v196
    %v628 = vmul.f32 %v597, %v200
    %v629 = vmul.f32 %v595, %v204
    %v630 = vmul.f32 %v601, %v208
    %v631 = vmul.f32 %v600, %v196
    %v632 = vmul.f32 %v598, %v200
    %v633 = vmul.f32 %v596, %v204
    %v634 = vmul.f32 %v602, %v208
    %v635 = vadd.f32 %v619, %v627
    %v636 = vadd.f32 %v620, %v628
    %v637 = vadd.f32 %v621, %v629
    %v638 = vadd.f32 %v622, %v630
    %v639 = vadd.f32 %v623, %v631
    %v640 = vadd.f32 %v624, %v632
    %v641 = vadd.f32 %v625, %v633
    %v642 = vadd.f32 %v626, %v634
    %v643 = vmul.f32 %v577, %v233
    %v644 = vmul.f32 %v575, %v237
    %v645 = vmul.f32 %v573, %v241
    %v646 = vmul.f32 %v571, %v245
    %v647 = vmul.f32 %v578, %v233
    %v648 = vmul.f32 %v576, %v237
    %v649 = vmul.f32 %v574, %v241
    %v650 = vmul.f32 %v572, %v245
    %v651 = vmul.f32 %v547, %v262
    %v652 = vmul.f32 %v548, %v266
    %v653 = vmul.f32 %v549, %v270
    %v654 = vmul.f32 %v550, %v274
    %v655 = vmul.f32 %v551, %v262
    %v656 = vmul.f32 %v552, %v266
    %v657 = vmul.f32 %v553, %v270
    %v658 = vmul.f32 %v554, %v274
    %v659 = vadd.f32 %v643, %v651
    %v660 = vadd.f32 %v644, %v652
    %v661 = vadd.f32 %v645, %v653
    %v662 = vadd.f32 %v646, %v654
    %v663 = vadd.f32 %v647, %v655
    %v664 = vadd.f32 %v648, %v656
    %v665 = vadd.f32 %v649, %v657
    %v666 = vadd.f32 %v650, %v658
    %v667 = vmul.f32 %v599, %v299
    %v668 = vmul.f32 %v597, %v303
    %v669 = vmul.f32 %v595, %v307
    %v670 = vmul.f32 %v601, %v311
    %v671 = vmul.f32 %v600, %v299
    %v672 = vmul.f32 %v598, %v303
    %v673 = vmul.f32 %v596, %v307
    %v674 = vmul.f32 %v602, %v311
    %v675 = vadd.f32 %v659, %v667
    %v676 = vadd.f32 %v660, %v668
    %v677 = vadd.f32 %v661, %v669
    %v678 = vadd.f32 %v662, %v670
    %v679 = vadd.f32 %v663, %v671
    %v680 = vadd.f32 %v664, %v672
    %v681 = vadd.f32 %v665, %v673
    %v682 = vadd.f32 %v666, %v674
    %v683 = vmul.f32 %v577, %v336
    %v684 = vmul.f32 %v575, %v340
    %v685 = vmul.f32 %v573, %v344
    %v686 = vmul.f32 %v571, %v348
    %v687 = vmul.f32 %v578, %v336
    %v688 = vmul.f32 %v576, %v340
    %v689 = vmul.f32 %v574, %v344
    %v690 = vmul.f32 %v572, %v348
    %v691 = vmul.f32 %v547, %v365
    %v692 = vmul.f32 %v548, %v369
    %v693 = vmul.f32 %v549, %v373
    %v694 = vmul.f32 %v550, %v377
    %v695 = vmul.f32 %v551, %v365
    %v696 = vmul.f32 %v552, %v369
    %v697 = vmul.f32 %v553, %v373
    %v698 = vmul.f32 %v554, %v377
    %v699 = vadd.f32 %v683, %v691
    %v700 = vadd.f32 %v684, %v692
    %v701 = vadd.f32 %v685, %v693
    %v702 = vadd.f32 %v686, %v694
    %v703 = vadd.f32 %v687, %v695
    %v704 = vadd.f32 %v688, %v696
    %v705 = vadd.f32 %v689, %v697
    %v706 = vadd.f32 %v690, %v698
    %v707 = vmul.f32 %v599, %v402
    %v708 = vmul.f32 %v597, %v406
    %v709 = vmul.f32 %v595, %v410
    %v710 = vmul.f32 %v601, %v414
    %v711 = vmul.f32 %v600, %v402
    %v712 = vmul.f32 %v598, %v406
    %v713 = vmul.f32 %v596, %v410
    %v714 = vmul.f32 %v602, %v414
    %v715 = vadd.f32 %v699, %v707
    %v716 = vadd.f32 %v700, %v708
    %v717 = vadd.f32 %v701, %v709
    %v718 = vadd.f32 %v702, %v710
    %v719 = vadd.f32 %v703, %v711
    %v720 = vadd.f32 %v704, %v712
    %v721 = vadd.f32 %v705, %v713
    %v722 = vadd.f32 %v706, %v714
    %v723 = vadd.f32 %v675, %v439
    %v724 = vadd.f32 %v676, %v443
    %v725 = vadd.f32 %v677, %v447
    %v726 = vadd.f32 %v678, %v451
    %v727 = vadd.f32 %v679, %v439
    %v728 = vadd.f32 %v680, %v443
    %v729 = vadd.f32 %v681, %v447
    %v730 = vadd.f32 %v682, %v451
    %v731 = vadd.f32 %v723, %v547
    %v732 = vadd.f32 %v724, %v548
    %v733 = vadd.f32 %v725, %v549
    %v734 = vadd.f32 %v726, %v550
    %v735 = vadd.f32 %v727, %v551
    %v736 = vadd.f32 %v728, %v552
    %v737 = vadd.f32 %v729, %v553
    %v738 = vadd.f32 %v730, %v554
    %v739 = vrot.slane %v635, 7
    %v740 = vrot.slane %v636, 7
    %v741 = vrot.slane %v637, 7
    %v742 = vrot.slane %v638, 7
    %v743 = vrot.slane %v639, 7
    %v744 = vrot.slane %v640, 7
    %v745 = vrot.slane %v641, 7
    %v746 = vrot.slane %v642, 7
    %v747 = vsel %vm480, %v739, %v743
    %v748 = vsel %vm480, %v740, %v744
    %v749 = vsel %vm480, %v741, %v745
    %v750 = vsel %vm480, %v742, %v746
    %v751 = vsel %vm480, %v743, %v739
    %v752 = vsel %vm480, %v744, %v740
    %v753 = vsel %vm480, %v745, %v741
    %v754 = vsel %vm480, %v746, %v742
    %v755 = vrot.slane %v715, 1
    %v756 = vrot.slane %v716, 1
    %v757 = vrot.slane %v717, 1
    %v758 = vrot.slane %v718, 1
    %v759 = vrot.slane %v719, 1
    %v760 = vrot.slane %v720, 1
    %v761 = vrot.slane %v721, 1
    %v762 = vrot.slane %v722, 1
    %v763 = vsel %vm497, %v755, %v759
    %v764 = vsel %vm497, %v756, %v760
    %v765 = vsel %vm497, %v757, %v761
    %v766 = vsel %vm497, %v758, %v762
    %v767 = vsel %vm497, %v759, %v755
    %v768 = vsel %vm497, %v760, %v756
    %v769 = vsel %vm497, %v761, %v757
    %v770 = vsel %vm497, %v762, %v758
    %v771 = vsel %vm62, %v751, 0.0
    %v772 = vsel %vm62, %v752, 0.0
    %v773 = vsel %vm62, %v753, 0.0
    %v774 = vsel %vm62, %v754, 0.0
    %v775 = vsel %vm63, %v747, 0.0
    %v776 = vsel %vm63, %v748, 0.0
    %v777 = vsel %vm63, %v749, 0.0
    %v778 = vsel %vm63, %v750, 0.0
    %v779 = vadd.f32 %v731, %v771
    %v780 = vadd.f32 %v732, %v772
    %v781 = vadd.f32 %v733, %v773
    %v782 = vadd.f32 %v734, %v774
    %v783 = vadd.f32 %v735, %v775
    %v784 = vadd.f32 %v736, %v776
    %v785 = vadd.f32 %v737, %v777
    %v786 = vadd.f32 %v738, %v778
    %v787 = vsel %vm64, %v763, 0.0
    %v788 = vsel %vm64, %v764, 0.0
    %v789 = vsel %vm64, %v765, 0.0
    %v790 = vsel %vm64, %v766, 0.0
    %v791 = vsel %vm65, %v767, 0.0
    %v792 = vsel %vm65, %v768, 0.0
    %v793 = vsel %vm65, %v769, 0.0
    %v794 = vsel %vm65, %v770, 0.0
    %v795 = vadd.f32 %v779, %v787
    %v796 = vadd.f32 %v780, %v788
    %v797 = vadd.f32 %v781, %v789
    %v798 = vadd.f32 %v782, %v790
    %v799 = vadd.f32 %v783, %v791
    %v800 = vadd.f32 %v784, %v792
    %v801 = vadd.f32 %v785, %v793
    %v802 = vadd.f32 %v786, %v794
    %s803 = scalar_lea.vmem [#allocation7], 64
    %804 = vst [vmem:[%s803] sm:$0xff] %v795
    %805 = vst [vmem:[%s803 + $0x8] sm:$0xff] %v796
    %806 = vst [vmem:[%s803 + $0x10] sm:$0xff] %v797
    %807 = vst [vmem:[%s803 + $0x18] sm:$0xff] %v798
    %808 = vst [vmem:[%s803 + $0x20] sm:$0xff] %v799
    %809 = vst [vmem:[%s803 + $0x28] sm:$0xff] %v800
    %810 = vst [vmem:[%s803 + $0x30] sm:$0xff] %v801
    %811 = vst [vmem:[%s803 + $0x38] sm:$0xff] %v802
    // Predicated region
    $region18: #{tpu_custom_call.1} parent=1 // pred_check
      _
    $region19: #{tpu_custom_call.1} parent=1 // pred_check_branch
      %813 = sbr.rel (0) target = $region21
    $region20: #{tpu_custom_call.1} parent=1 // pred_region
      %s815 = ssub.s32 2048, 2048
      %816 = vsyncadd [#allocation4], %s815
      %s817 = sshll.u32 [#allocation7], 4
      %s818 = int_to_ptr.vmem [resolvable:$true] %s817
      %823 = dma.vmem_to_hbm [thread:$0]  %s818, 2048, %s2, [#allocation4], 512, 512, 32
    $region21: #{tpu_custom_call.1} parent=1 // pred_fallthru
      _
    // Predicated region
    $region22: #{tpu_custom_call.1} parent=1 // pred_check
      _
    $region23: #{tpu_custom_call.1} parent=1 // pred_check_branch
      %825 = sbr.rel (0) target = $region25
    $region24: #{tpu_custom_call.1} parent=1 // pred_region
      %826 = dma.done [#allocation4], 2048
    $region25: #{tpu_custom_call.1} parent=1 // pred_fallthru
      _
    %827 = vsyncpa [#allocation3], 1
    %828 = vsyncpa [#allocation6], 1
    %829 = vsyncpa [#allocation4], 1

</llo_original>
